<compile_context>
chip_gen: v7x
topology: tpu7x:2x2x1
jax: 0.10.0
libtpu: 0.0.40
codegen_flags: <defaults>
</compile_context>

<pallas_src>
from functools import partial

import jax
import jax.numpy as jnp
from jax import lax
from jax.experimental import pallas as pl
from jax.experimental.pallas import tpu as pltpu


def _round_up(x, m):
    return (x + m - 1) // m * m


# --------------------------------------------------------------------------- #
# Kernel bodies
# --------------------------------------------------------------------------- #
def _tokens_from_refs(xc_ref, xn_ref, wc_ref, wn_ref, b_ref):
    """Folded FeatureTokenizer: lane-dense (tb, TD_pad) f32 token slab in VMEM.

    xc_ref : (tb, C)       one-hot categoricals   (bf16)
    xn_ref : (tb, N)       numerical features     (bf16)
    wc_ref : (C, TD_pad)   folded categorical weight (block-diagonal, bf16)
    wn_ref : (N, TD_pad)   folded numerical weight (bf16)
    b_ref  : (1, TD_pad)   folded bias row (per-token bias + CLS token), f32
    """
    y = jnp.dot(xc_ref[...], wc_ref[...], preferred_element_type=jnp.float32)
    y = y + jnp.dot(xn_ref[...], wn_ref[...], preferred_element_type=jnp.float32)
    return y + b_ref[...]


def _tokenizer_kernel(xc_ref, xn_ref, wc_ref, wn_ref, b_ref, tok_ref):
    """Standalone tokenizer (used to expose/verify the token intermediate)."""
    tok_ref[...] = _tokens_from_refs(
        xc_ref, xn_ref, wc_ref, wn_ref, b_ref).astype(tok_ref.dtype)


def _fused_kernel(xc_ref, xn_ref, wc_ref, wn_ref, b_ref,
                  g_ref, lb_ref, wl_ref, bl_ref, out_ref,
                  *, cls_start, d_tok):
    """FeatureTokenizer -> (identity transformer) -> Bert_Head, fused per row tile.

    g_ref  : (1, D)        LayerNorm weight (f32)
    lb_ref : (1, D)        LayerNorm bias   (f32)
    wl_ref : (D, H_pad)    head Linear weight, pre-transposed + lane-padded (bf16)
    bl_ref : (1, H_pad)    head Linear bias, lane-padded (f32)
    out_ref: (tb, H_pad)   lane-dense head output (f32)
    """
    tokens = _tokens_from_refs(xc_ref, xn_ref, wc_ref, wn_ref, b_ref)  # (tb, TD_pad)

    # TODO(synk): `transformer` is gin-injected in the reference module and its
    # architecture is not given in the provided source; applied as identity here.

    x = tokens[:, cls_start:cls_start + d_tok]              # CLS (last) token, (tb, D)
    mean = jnp.mean(x, axis=-1, keepdims=True)
    xc = x - mean
    var = jnp.mean(xc * xc, axis=-1, keepdims=True)
    y = xc * lax.rsqrt(var + 1e-5)                          # nn.LayerNorm eps
    y = y * g_ref[...] + lb_ref[...]
    y = jnp.maximum(y, 0.0)                                  # ReLU
    out = jnp.dot(y.astype(wl_ref.dtype), wl_ref[...],
                  preferred_element_type=jnp.float32)
    out_ref[...] = (out + bl_ref[...]).astype(out_ref.dtype)


# --------------------------------------------------------------------------- #
# Parameter folding (done once, outside the kernel)
# --------------------------------------------------------------------------- #
def _fold_tokenizer_params(params, categories):
    """Fold FeatureTokenizer params into  x_cat @ Wc + x_num @ Wn + b  (lane-dense).

    Token t occupies columns [t*D, (t+1)*D); column count is padded to a multiple
    of 128.  The CLS token (ones column of x_num_aug, zero bias) is folded into b.
    Mathematically identical to the PyTorch module.
    """
    w_num = params["weight_num"].astype(jnp.float32)         # (N+1, D)
    n_num = w_num.shape[0] - 1
    d_tok = w_num.shape[1]
    n_cat = len(categories)
    c_tot = sum(categories)
    n_tok = n_cat + n_num + 1
    td = n_tok * d_tok
    td_pad = _round_up(td, 128)

    w_cat = jnp.zeros((c_tot, td_pad), jnp.float32)
    off = 0
    for t, ci in enumerate(categories):
        # nn.Linear(ci, d_tok, bias=False): x @ weight.T, weight is (d_tok, ci)
        w_cat = w_cat.at[off:off + ci, t * d_tok:(t + 1) * d_tok].set(
            params["weight_cat"][t].T.astype(jnp.float32))
        off += ci

    w_nf = jnp.zeros((n_num, td_pad), jnp.float32)
    for j in range(n_num):
        col = (n_cat + j) * d_tok
        w_nf = w_nf.at[j, col:col + d_tok].set(w_num[j])

    b = jnp.zeros((1, td_pad), jnp.float32)
    b = b.at[0, :(n_tok - 1) * d_tok].set(
        params["bias"].astype(jnp.float32).reshape(-1))
    b = b.at[0, (n_tok - 1) * d_tok:td].set(w_num[n_num])     # CLS token
    return w_cat, w_nf, b, d_tok, td, td_pad


def _prep_inputs(x_cat2, x_num2, row_tile):
    """bf16-cast + zero-pad rows to a multiple of the row tile."""
    bs = x_cat2.shape[0]
    row_tile = _round_up(max(row_tile, 16), 16)               # bf16 sublane packing
    tb = min(row_tile, _round_up(bs, 16))
    bs_pad = _round_up(bs, tb)
    xc = x_cat2.astype(jnp.bfloat16)
    xn = x_num2.astype(jnp.bfloat16)
    if bs_pad != bs:
        xc = jnp.pad(xc, ((0, bs_pad - bs), (0, 0)))
        xn = jnp.pad(xn, ((0, bs_pad - bs), (0, 0)))
    return xc, xn, tb, bs_pad


# --------------------------------------------------------------------------- #
# Wrappers
# --------------------------------------------------------------------------- #
def feature_tokenizer(x_cat2, x_num2, params, categories, *, row_tile=256):
    """FeatureTokenizer.forward on flattened (B*S, .) inputs -> (B*S, T*D) tokens."""
    bs = x_cat2.shape[0]
    c_tot, n_num = x_cat2.shape[1], x_num2.shape[1]
    w_cat, w_nf, b_fold, _, td, td_pad = _fold_tokenizer_params(params, categories)
    xc, xn, tb, bs_pad = _prep_inputs(x_cat2, x_num2, row_tile)

    out = pl.pallas_call(
        _tokenizer_kernel,
        out_shape=jax.ShapeDtypeStruct((bs_pad, td_pad), jnp.float32),
        grid_spec=pltpu.PrefetchScalarGridSpec(
            num_scalar_prefetch=0,
            grid=(bs_pad // tb,),
            in_specs=[
                pl.BlockSpec((tb, c_tot), lambda i: (i, 0)),
                pl.BlockSpec((tb, n_num), lambda i: (i, 0)),
                pl.BlockSpec((c_tot, td_pad), lambda i: (0, 0)),   # resident
                pl.BlockSpec((n_num, td_pad), lambda i: (0, 0)),   # resident
                pl.BlockSpec((1, td_pad), lambda i: (0, 0)),       # resident
            ],
            out_specs=pl.BlockSpec((tb, td_pad), lambda i: (i, 0)),
        ),
        compiler_params=pltpu.CompilerParams(
            dimension_semantics=("parallel",)),
    )(xc, xn, w_cat.astype(jnp.bfloat16), w_nf.astype(jnp.bfloat16), b_fold)
    return out[:bs, :td]


def feature_tokenizer_transformer(x, params, categories, *, row_tile=256):
    """Forward pass of FeatureTokenizer_Transformer (fused single pallas_call).

    x = (x_cat, x_num):
      x_cat: (B, S, sum(categories)) already one-hot encoded categoricals
      x_num: (B, S, d_numerical)
    Returns (B, S, hidden_dim).
    """
    x_cat, x_num = x
    b, s, c_tot = x_cat.shape
    n_num = x_num.shape[-1]
    bs = b * s

    w_cat, w_nf, b_fold, d_tok, td, td_pad = _fold_tokenizer_params(params, categories)

    h_dim = params["linear_w"].shape[0]
    h_pad = _round_up(h_dim, 128)
    ln_g = params["ln_weight"].reshape(1, d_tok).astype(jnp.float32)
    ln_b = params["ln_bias"].reshape(1, d_tok).astype(jnp.float32)
    w_l = jnp.zeros((d_tok, h_pad), jnp.float32).at[:, :h_dim].set(
        params["linear_w"].T.astype(jnp.float32)).astype(jnp.bfloat16)
    b_l = jnp.zeros((1, h_pad), jnp.float32).at[0, :h_dim].set(
        params["linear_b"].astype(jnp.float32))

    xc, xn, tb, bs_pad = _prep_inputs(x_cat.reshape(bs, c_tot),
                                      x_num.reshape(bs, n_num), row_tile)

    kernel = partial(_fused_kernel, cls_start=td - d_tok, d_tok=d_tok)
    out = pl.pallas_call(
        kernel,
        out_shape=jax.ShapeDtypeStruct((bs_pad, h_pad), jnp.float32),
        grid_spec=pltpu.PrefetchScalarGridSpec(
            num_scalar_prefetch=0,
            grid=(bs_pad // tb,),
            in_specs=[
                pl.BlockSpec((tb, c_tot), lambda i: (i, 0)),       # row tile x_cat
                pl.BlockSpec((tb, n_num), lambda i: (i, 0)),       # row tile x_num
                pl.BlockSpec((c_tot, td_pad), lambda i: (0, 0)),   # folded Wc (resident)
                pl.BlockSpec((n_num, td_pad), lambda i: (0, 0)),   # folded Wn (resident)
                pl.BlockSpec((1, td_pad), lambda i: (0, 0)),       # folded bias
                pl.BlockSpec((1, d_tok), lambda i: (0, 0)),        # LN weight
                pl.BlockSpec((1, d_tok), lambda i: (0, 0)),        # LN bias
                pl.BlockSpec((d_tok, h_pad), lambda i: (0, 0)),    # head weight
                pl.BlockSpec((1, h_pad), lambda i: (0, 0)),        # head bias
            ],
            out_specs=pl.BlockSpec((tb, h_pad), lambda i: (i, 0)),
        ),
        compiler_params=pltpu.CompilerParams(
            dimension_semantics=("parallel",)),
    )(xc, xn, w_cat.astype(jnp.bfloat16), w_nf.astype(jnp.bfloat16), b_fold,
      ln_g, ln_b, w_l, b_l)

    return out[:bs, :h_dim].reshape(b, s, h_dim)


# --------------------------------------------------------------------------- #
# Pure-JAX reference (mirrors the PyTorch forward, identity transformer)
# --------------------------------------------------------------------------- #
def _reference_forward(x_cat, x_num, params, categories):
    b, s, c_tot = x_cat.shape
    n_num = x_num.shape[-1]
    d_tok = params["weight_num"].shape[1]
    bs = b * s
    xc = x_cat.reshape(bs, c_tot).astype(jnp.float32)
    xn = x_num.reshape(bs, n_num).astype(jnp.float32)

    # FeatureTokenizer
    xna = jnp.concatenate([xn, jnp.ones((bs, 1), jnp.float32)], axis=-1)
    num_tok = params["weight_num"][None] * xna[..., None]            # (BS, N+1, D)
    cat_toks, off = [], 0
    for i, ci in enumerate(categories):
        cat_toks.append(xc[:, off:off + ci] @ params["weight_cat"][i].T)
        off += ci
    cat_tok = jnp.stack(cat_toks, axis=-2)                           # (BS, n_cat, D)
    tokens = jnp.concatenate([cat_tok, num_tok], axis=-2)            # (BS, T, D)
    bias_full = jnp.concatenate(
        [params["bias"].astype(jnp.float32), jnp.zeros((1, d_tok), jnp.float32)])
    tokens = tokens + bias_full[None]

    # transformer: identity (matches the TODO in the Pallas path), then Bert_Head
    x = tokens[:, -1]
    mean = jnp.mean(x, axis=-1, keepdims=True)
    xcen = x - mean
    var = jnp.mean(xcen * xcen, axis=-1, keepdims=True)
    y = xcen * lax.rsqrt(var + 1e-5)
    y = y * params["ln_weight"] + params["ln_bias"]
    y = jnp.maximum(y, 0.0)
    out = y @ params["linear_w"].T + params["linear_b"]
    return tokens, out.reshape(b, s, -1)


if __name__ == "__main__":
    key = jax.random.PRNGKey(0)
    B, S = 2, 8                        # batch, sequence
    categories = (4, 6, 13, 5)         # one-hot widths (docstring example)
    N = 5                              # d_numerical
    D = 32                             # token_dim
    H = 24                             # hidden_dim
    C = sum(categories)
    n_cat = len(categories)
    T = n_cat + N + 1                  # tokens incl. CLS

    ks = jax.random.split(key, 9)
    params = {
        # FeatureTokenizer parameters
        "weight_num": 0.2 * jax.random.normal(ks[0], (N + 1, D), jnp.float32),
        "weight_cat": [0.2 * jax.random.normal(jax.random.fold_in(ks[1], i),
                                               (D, ci), jnp.float32)
                       for i, ci in enumerate(categories)],
        "bias": 0.2 * jax.random.normal(ks[2], (N + n_cat, D), jnp.float32),
        # Bert_Head parameters
        "ln_weight": 1.0 + 0.1 * jax.random.normal(ks[3], (D,), jnp.float32),
        "ln_bias": 0.1 * jax.random.normal(ks[4], (D,), jnp.float32),
        "linear_w": 0.2 * jax.random.normal(ks[5], (H, D), jnp.float32),
        "linear_b": 0.1 * jax.random.normal(ks[6], (H,), jnp.float32),
    }

    # Inputs: numerical features + concatenated one-hot categoricals.
    x_num = jax.random.normal(ks[7], (B, S, N), jnp.float32)
    onehots = []
    for i, ci in enumerate(categories):
        idx = jax.random.randint(jax.random.fold_in(ks[8], i), (B, S), 0, ci)
        onehots.append(jax.nn.one_hot(idx, ci, dtype=jnp.float32))
    x_cat = jnp.concatenate(onehots, axis=-1)                # (B, S, C)

    # Fused forward (tokenizer + identity transformer + head in one pallas_call).
    out = feature_tokenizer_transformer((x_cat, x_num), params, categories)
    out = jax.block_until_ready(out)

    # Verify the FeatureTokenizer intermediate with the standalone tokenizer kernel
    # (the fused path never writes the token slab to HBM).
    tokens_flat = jax.block_until_ready(
        feature_tokenizer(x_cat.reshape(B * S, C), x_num.reshape(B * S, N),
                          params, categories))

    ref_tokens, ref_out = _reference_forward(x_cat, x_num, params, categories)

    assert out.shape == (B, S, H)
    # Tolerance accounts for bf16 MXU operands (f32 accumulation) in the kernels.
    assert jnp.allclose(tokens_flat, ref_tokens.reshape(B * S, T * D),
                        atol=1e-2, rtol=1e-2), "tokenizer mismatch"
    assert jnp.allclose(out, ref_out, atol=1e-2, rtol=1e-2), "head mismatch"
    print("KERNEL_OK")
</pallas_src>

<mosaic_0001>
module attributes {stable_mosaic.version = 11 : i64} {
  func.func @_fused_kernel(%arg0: i32, %arg1: memref<16x28xbf16, #tpu.memory_space<vmem>>, %arg2: memref<16x5xbf16, #tpu.memory_space<vmem>>, %arg3: memref<28x384xbf16, #tpu.memory_space<vmem>>, %arg4: memref<5x384xbf16, #tpu.memory_space<vmem>>, %arg5: memref<1x384xf32, #tpu.memory_space<vmem>>, %arg6: memref<1x32xf32, #tpu.memory_space<vmem>>, %arg7: memref<1x32xf32, #tpu.memory_space<vmem>>, %arg8: memref<32x128xbf16, #tpu.memory_space<vmem>>, %arg9: memref<1x128xf32, #tpu.memory_space<vmem>>, %arg10: memref<16x128xf32, #tpu.memory_space<vmem>>) attributes {dimension_semantics = [#tpu.dimension_semantics<parallel>], iteration_bounds = array<i64: 1>, scalar_prefetch = 0 : i64, scratch_operands = 0 : i64, tpu.core_type = #tpu.core_type<tc>, window_params = [{transform_indices = @transform_0, window_bounds = array<i64: 16, 28>}, {transform_indices = @transform_1, window_bounds = array<i64: 16, 5>}, {pipeline_mode = #tpu.pipeline_mode<synchronous>, transform_indices = @transform_2, window_bounds = array<i64: 28, 384>}, {pipeline_mode = #tpu.pipeline_mode<synchronous>, transform_indices = @transform_3, window_bounds = array<i64: 5, 384>}, {pipeline_mode = #tpu.pipeline_mode<synchronous>, transform_indices = @transform_4, window_bounds = array<i64: 1, 384>}, {pipeline_mode = #tpu.pipeline_mode<synchronous>, transform_indices = @transform_5, window_bounds = array<i64: 1, 32>}, {pipeline_mode = #tpu.pipeline_mode<synchronous>, transform_indices = @transform_6, window_bounds = array<i64: 1, 32>}, {pipeline_mode = #tpu.pipeline_mode<synchronous>, transform_indices = @transform_7, window_bounds = array<i64: 32, 128>}, {pipeline_mode = #tpu.pipeline_mode<synchronous>, transform_indices = @transform_8, window_bounds = array<i64: 1, 128>}, {transform_indices = @transform_9, window_bounds = array<i64: 16, 128>}]} {
    %c0 = arith.constant 0 : index
    %c0_0 = arith.constant 0 : index
    %0 = vector.load %arg1[%c0, %c0_0] : memref<16x28xbf16, #tpu.memory_space<vmem>>, vector<16x28xbf16>
    %c0_1 = arith.constant 0 : index
    %c0_2 = arith.constant 0 : index
    %1 = vector.load %arg3[%c0_1, %c0_2] : memref<28x384xbf16, #tpu.memory_space<vmem>>, vector<28x384xbf16>
    %cst = arith.constant dense<0.000000e+00> : vector<16x384xf32>
    %2 = tpu.matmul %0, %1, %cst {dimension_numbers = #tpu.dot_dimension_numbers<[1], [0], [0], [1], [0, 0, 1, 1], [], []>} : vector<16x28xbf16>, vector<28x384xbf16>, vector<16x384xf32> -> vector<16x384xf32>
    %c0_3 = arith.constant 0 : index
    %c0_4 = arith.constant 0 : index
    %3 = vector.load %arg2[%c0_3, %c0_4] : memref<16x5xbf16, #tpu.memory_space<vmem>>, vector<16x5xbf16>
    %c0_5 = arith.constant 0 : index
    %c0_6 = arith.constant 0 : index
    %4 = vector.load %arg4[%c0_5, %c0_6] : memref<5x384xbf16, #tpu.memory_space<vmem>>, vector<5x384xbf16>
    %cst_7 = arith.constant dense<0.000000e+00> : vector<16x384xf32>
    %5 = tpu.matmul %3, %4, %cst_7 {dimension_numbers = #tpu.dot_dimension_numbers<[1], [0], [0], [1], [0, 0, 1, 1], [], []>} : vector<16x5xbf16>, vector<5x384xbf16>, vector<16x384xf32> -> vector<16x384xf32>
    %6 = arith.addf %2, %5 : vector<16x384xf32>
    %c0_8 = arith.constant 0 : index
    %c0_9 = arith.constant 0 : index
    %7 = vector.load %arg5[%c0_8, %c0_9] : memref<1x384xf32, #tpu.memory_space<vmem>>, vector<1x384xf32>
    %8 = vector.broadcast %7 : vector<1x384xf32> to vector<16x384xf32>
    %9 = arith.addf %6, %8 : vector<16x384xf32>
    %10 = vector.extract_strided_slice %9 {offsets = [0, 288], sizes = [16, 32], strides = [1, 1]} : vector<16x384xf32> to vector<16x32xf32>
    %cst_10 = arith.constant dense<0.000000e+00> : vector<16xf32>
    %11 = vector.multi_reduction <add>, %10, %cst_10 [1] : vector<16x32xf32> to vector<16xf32>
    %12 = vector.shape_cast %11 : vector<16xf32> to vector<16x1xf32>
    %cst_11 = arith.constant 3.200000e+01 : f32
    %13 = vector.broadcast %cst_11 : f32 to vector<16x1xf32>
    %14 = arith.divf %12, %13 : vector<16x1xf32>
    %15 = vector.broadcast %14 : vector<16x1xf32> to vector<16x32xf32>
    %16 = arith.subf %10, %15 : vector<16x32xf32>
    %17 = arith.mulf %16, %16 : vector<16x32xf32>
    %cst_12 = arith.constant dense<0.000000e+00> : vector<16xf32>
    %18 = vector.multi_reduction <add>, %17, %cst_12 [1] : vector<16x32xf32> to vector<16xf32>
    %19 = vector.shape_cast %18 : vector<16xf32> to vector<16x1xf32>
    %cst_13 = arith.constant 3.200000e+01 : f32
    %20 = vector.broadcast %cst_13 : f32 to vector<16x1xf32>
    %21 = arith.divf %19, %20 : vector<16x1xf32>
    %cst_14 = arith.constant 9.99999974E-6 : f32
    %22 = vector.broadcast %cst_14 : f32 to vector<16x1xf32>
    %23 = arith.addf %21, %22 : vector<16x1xf32>
    %24 = math.rsqrt %23 : vector<16x1xf32>
    %25 = vector.broadcast %24 : vector<16x1xf32> to vector<16x32xf32>
    %26 = arith.mulf %16, %25 : vector<16x32xf32>
    %c0_15 = arith.constant 0 : index
    %c0_16 = arith.constant 0 : index
    %27 = vector.load %arg6[%c0_15, %c0_16] : memref<1x32xf32, #tpu.memory_space<vmem>>, vector<1x32xf32>
    %28 = vector.broadcast %27 : vector<1x32xf32> to vector<16x32xf32>
    %29 = arith.mulf %26, %28 : vector<16x32xf32>
    %c0_17 = arith.constant 0 : index
    %c0_18 = arith.constant 0 : index
    %30 = vector.load %arg7[%c0_17, %c0_18] : memref<1x32xf32, #tpu.memory_space<vmem>>, vector<1x32xf32>
    %31 = vector.broadcast %30 : vector<1x32xf32> to vector<16x32xf32>
    %32 = arith.addf %29, %31 : vector<16x32xf32>
    %cst_19 = arith.constant 0.000000e+00 : f32
    %33 = vector.broadcast %cst_19 : f32 to vector<16x32xf32>
    %34 = arith.maximumf %32, %33 : vector<16x32xf32>
    %35 = arith.truncf %34 : vector<16x32xf32> to vector<16x32xbf16>
    %c0_20 = arith.constant 0 : index
    %c0_21 = arith.constant 0 : index
    %36 = vector.load %arg8[%c0_20, %c0_21] : memref<32x128xbf16, #tpu.memory_space<vmem>>, vector<32x128xbf16>
    %cst_22 = arith.constant dense<0.000000e+00> : vector<16x128xf32>
    %37 = tpu.matmul %35, %36, %cst_22 {dimension_numbers = #tpu.dot_dimension_numbers<[1], [0], [0], [1], [0, 0, 1, 1], [], []>} : vector<16x32xbf16>, vector<32x128xbf16>, vector<16x128xf32> -> vector<16x128xf32>
    %c0_23 = arith.constant 0 : index
    %c0_24 = arith.constant 0 : index
    %38 = vector.load %arg9[%c0_23, %c0_24] : memref<1x128xf32, #tpu.memory_space<vmem>>, vector<1x128xf32>
    %39 = vector.broadcast %38 : vector<1x128xf32> to vector<16x128xf32>
    %40 = arith.addf %37, %39 : vector<16x128xf32>
    %c0_25 = arith.constant 0 : index
    %c0_26 = arith.constant 0 : index
    %41 = vector.load %arg10[%c0_25, %c0_26] : memref<16x128xf32, #tpu.memory_space<vmem>>, vector<16x128xf32>
    tpu.vector_store %arg10[%c0_25, %c0_26], %40 {strides = array<i32>} : memref<16x128xf32, #tpu.memory_space<vmem>>, vector<16x128xf32>,
    return
  }
  func.func @transform_0(%arg0: i32) -> (i32, i32) {
    %c0_i32 = arith.constant 0 : i32
    %c0_i32_0 = arith.constant 0 : i32
    return %arg0, %c0_i32 : i32, i32
  }
  func.func @transform_1(%arg0: i32) -> (i32, i32) {
    %c0_i32 = arith.constant 0 : i32
    %c0_i32_0 = arith.constant 0 : i32
    return %arg0, %c0_i32 : i32, i32
  }
  func.func @transform_2(%arg0: i32) -> (i32, i32) {
    %c0_i32 = arith.constant 0 : i32
    %c0_i32_0 = arith.constant 0 : i32
    %c0_i32_1 = arith.constant 0 : i32
    return %c0_i32, %c0_i32_0 : i32, i32
  }
  func.func @transform_3(%arg0: i32) -> (i32, i32) {
    %c0_i32 = arith.constant 0 : i32
    %c0_i32_0 = arith.constant 0 : i32
    %c0_i32_1 = arith.constant 0 : i32
    return %c0_i32, %c0_i32_0 : i32, i32
  }
  func.func @transform_4(%arg0: i32) -> (i32, i32) {
    %c0_i32 = arith.constant 0 : i32
    %c0_i32_0 = arith.constant 0 : i32
    %c0_i32_1 = arith.constant 0 : i32
    return %c0_i32, %c0_i32_0 : i32, i32
  }
  func.func @transform_5(%arg0: i32) -> (i32, i32) {
    %c0_i32 = arith.constant 0 : i32
    %c0_i32_0 = arith.constant 0 : i32
    %c0_i32_1 = arith.constant 0 : i32
    return %c0_i32, %c0_i32_0 : i32, i32
  }
  func.func @transform_6(%arg0: i32) -> (i32, i32) {
    %c0_i32 = arith.constant 0 : i32
    %c0_i32_0 = arith.constant 0 : i32
    %c0_i32_1 = arith.constant 0 : i32
    return %c0_i32, %c0_i32_0 : i32, i32
  }
  func.func @transform_7(%arg0: i32) -> (i32, i32) {
    %c0_i32 = arith.constant 0 : i32
    %c0_i32_0 = arith.constant 0 : i32
    %c0_i32_1 = arith.constant 0 : i32
    return %c0_i32, %c0_i32_0 : i32, i32
  }
  func.func @transform_8(%arg0: i32) -> (i32, i32) {
    %c0_i32 = arith.constant 0 : i32
    %c0_i32_0 = arith.constant 0 : i32
    %c0_i32_1 = arith.constant 0 : i32
    return %c0_i32, %c0_i32_0 : i32, i32
  }
  func.func @transform_9(%arg0: i32) -> (i32, i32) {
    %c0_i32 = arith.constant 0 : i32
    %c0_i32_0 = arith.constant 0 : i32
    return %arg0, %c0_i32 : i32, i32
  }
}

</mosaic_0001>

<llo_original>
// kernel: tpu_custom_call.1
$region0: #{tpu_custom_call.1}
  #allocation0 [shape = 'u32[]', space=smem, size = 0x4, offset = 0x4, fixed_abs, tag = 'smem constant byte address 0x4 - core index']
  #allocation1 [shape = 'u32[144,128]{1,0:T(1,128)}', space=vmem, size = 0x12000, scoped, tag = 'internal scratch']
  %s0 = inlined_call_operand.hbm [shape: bf16[16,28], index: 0, kind: input, shape index: {}]
  %s1 = inlined_call_operand.vmem [shape: bf16[16,5], index: 1, kind: input, shape index: {}]
  %s2 = inlined_call_operand.hbm [shape: bf16[28,384], index: 2, kind: input, shape index: {}]
  %s3 = inlined_call_operand.vmem [shape: bf16[5,384], index: 3, kind: input, shape index: {}]
  %s4 = inlined_call_operand.hbm [shape: f32[1,384], index: 4, kind: input, shape index: {}]
  %s5 = inlined_call_operand.vmem [shape: f32[1,32], index: 5, kind: input, shape index: {}]
  %s6 = inlined_call_operand.vmem [shape: f32[1,32], index: 6, kind: input, shape index: {}]
  %s7 = inlined_call_operand.vmem [shape: bf16[32,128], index: 7, kind: input, shape index: {}]
  %s8 = inlined_call_operand.vmem [shape: f32[1,128], index: 8, kind: input, shape index: {}]
  %s9 = inlined_call_operand.hbm [shape: f32[16,128], index: 9, kind: output, shape index: {}]
  %s10 = sld [smem:[#allocation0]]
  $region58: #{tpu_custom_call.1} parent=0
    _
  %s12 = ssub.s32 1, %s10
  %s13 = scalar_select 0, %s12, %s10
  $region1: #{tpu_custom_call.1} parent=0
    #allocation2 [shape = 'u8[4096]{0}', space=vmem, size = 0x1000, scoped, tag = 'input window, operand 0, single buffered']
    #allocation3 [shape = 's32[1]{0}', space=sflag, size = 0x4, scoped, tag = 'scoped memory for tpu_custom_call.1']
    #allocation4 [shape = 's32[1]{0}', space=sflag, size = 0x4, scoped, tag = 'scoped memory for tpu_custom_call.1']
    #allocation5 [shape = 'u8[24576]{0}', space=vmem, size = 0x6000, scoped, tag = 'input window, operand 2, single buffered']
    #allocation6 [shape = 's32[1]{0}', space=sflag, size = 0x4, scoped, tag = 'scoped memory for tpu_custom_call.1']
    #allocation7 [shape = 'u8[1536]{0}', space=vmem, size = 0x800, scoped, tag = 'input window, operand 4, single buffered']
    #allocation8 [shape = 'u8[8192]{0}', space=vmem, size = 0x2000, scoped, tag = 'output window, operand 0, single buffered']
    %14 = vsyncpa [#allocation3], 0
    %15 = vsyncpa [#allocation6], 0
    %16 = vsyncpa [#allocation4], 0
    // Predicated region
    $region2: #{tpu_custom_call.1} parent=1 // pred_check
      _
    $region3: #{tpu_custom_call.1} parent=1 // pred_check_branch
      %18 = sbr.rel (0) target = $region5
    $region4: #{tpu_custom_call.1} parent=1 // pred_region
      %s20 = ssub.s32 128, 128
      %21 = vsyncadd [#allocation3], %s20
      %s22 = sshll.u32 [#allocation2], 4
      %s23 = int_to_ptr.vmem [resolvable:$true] %s22
      %28 = dma.hbm_to_vmem [thread:$0]  %s0, 128, %s23, [#allocation3], 64, 64, 4
    $region5: #{tpu_custom_call.1} parent=1 // pred_fallthru
      _
    // Predicated region
    $region6: #{tpu_custom_call.1} parent=1 // pred_check
      _
    $region7: #{tpu_custom_call.1} parent=1 // pred_check_branch
      %30 = sbr.rel (0) target = $region9
    $region8: #{tpu_custom_call.1} parent=1 // pred_region
      _
    $region9: #{tpu_custom_call.1} parent=1 // pred_fallthru
      _
    // Predicated region
    $region10: #{tpu_custom_call.1} parent=1 // pred_check
      _
    $region11: #{tpu_custom_call.1} parent=1 // pred_check_branch
      %32 = sbr.rel (0) target = $region13
    $region12: #{tpu_custom_call.1} parent=1 // pred_region
      %s34 = ssub.s32 768, 768
      %35 = vsyncadd [#allocation6], %s34
      %s36 = sshll.u32 [#allocation5], 4
      %s37 = int_to_ptr.vmem [resolvable:$true] %s36
      %42 = dma.hbm_to_vmem [thread:$0]  %s2, 768, %s37, [#allocation6], 192, 192, 12
    $region13: #{tpu_custom_call.1} parent=1 // pred_fallthru
      _
    // Predicated region
    $region14: #{tpu_custom_call.1} parent=1 // pred_check
      _
    $region15: #{tpu_custom_call.1} parent=1 // pred_check_branch
      %44 = sbr.rel (0) target = $region17
    $region16: #{tpu_custom_call.1} parent=1 // pred_region
      _
    $region17: #{tpu_custom_call.1} parent=1 // pred_fallthru
      _
    // Predicated region
    $region18: #{tpu_custom_call.1} parent=1 // pred_check
      _
    $region19: #{tpu_custom_call.1} parent=1 // pred_check_branch
      %46 = sbr.rel (0) target = $region21
    $region20: #{tpu_custom_call.1} parent=1 // pred_region
      %s48 = ssub.s32 48, 48
      %49 = vsyncadd [#allocation6], %s48
      %s51 = sshll.u32 [#allocation7], 4
      %s52 = int_to_ptr.vmem [resolvable:$true] %s51
      %54 = dma.hbm_to_vmem [thread:$0]  %s4, 48, %s52, [#allocation6]
    $region21: #{tpu_custom_call.1} parent=1 // pred_fallthru
      _
    // Predicated region
    $region22: #{tpu_custom_call.1} parent=1 // pred_check
      _
    $region23: #{tpu_custom_call.1} parent=1 // pred_check_branch
      %56 = sbr.rel (0) target = $region25
    $region24: #{tpu_custom_call.1} parent=1 // pred_region
      _
    $region25: #{tpu_custom_call.1} parent=1 // pred_fallthru
      _
    // Predicated region
    $region26: #{tpu_custom_call.1} parent=1 // pred_check
      _
    $region27: #{tpu_custom_call.1} parent=1 // pred_check_branch
      %58 = sbr.rel (0) target = $region29
    $region28: #{tpu_custom_call.1} parent=1 // pred_region
      _
    $region29: #{tpu_custom_call.1} parent=1 // pred_fallthru
      _
    // Predicated region
    $region30: #{tpu_custom_call.1} parent=1 // pred_check
      _
    $region31: #{tpu_custom_call.1} parent=1 // pred_check_branch
      %60 = sbr.rel (0) target = $region33
    $region32: #{tpu_custom_call.1} parent=1 // pred_region
      _
    $region33: #{tpu_custom_call.1} parent=1 // pred_fallthru
      _
    // Predicated region
    $region34: #{tpu_custom_call.1} parent=1 // pred_check
      _
    $region35: #{tpu_custom_call.1} parent=1 // pred_check_branch
      %62 = sbr.rel (0) target = $region37
    $region36: #{tpu_custom_call.1} parent=1 // pred_region
      _
    $region37: #{tpu_custom_call.1} parent=1 // pred_fallthru
      _
    // Predicated region
    $region38: #{tpu_custom_call.1} parent=1 // pred_check
      _
    $region39: #{tpu_custom_call.1} parent=1 // pred_check_branch
      %64 = sbr.rel (0) target = $region41
    $region40: #{tpu_custom_call.1} parent=1 // pred_region
      %65 = dma.done [#allocation3], 128
    $region41: #{tpu_custom_call.1} parent=1 // pred_fallthru
      _
    // Predicated region
    $region42: #{tpu_custom_call.1} parent=1 // pred_check
      _
    $region43: #{tpu_custom_call.1} parent=1 // pred_check_branch
      %67 = sbr.rel (0) target = $region45
    $region44: #{tpu_custom_call.1} parent=1 // pred_region
      %68 = dma.done [#allocation6], 768
    $region45: #{tpu_custom_call.1} parent=1 // pred_fallthru
      _
    // Predicated region
    $region46: #{tpu_custom_call.1} parent=1 // pred_check
      _
    $region47: #{tpu_custom_call.1} parent=1 // pred_check_branch
      %70 = sbr.rel (0) target = $region49
    $region48: #{tpu_custom_call.1} parent=1 // pred_region
      %71 = dma.done [#allocation6], 48
    $region49: #{tpu_custom_call.1} parent=1 // pred_fallthru
      _
    %v73 = vld [vmem:[#allocation2] sm:$0xf]
    %v74 = vld [vmem:[#allocation2 + $0x4] sm:$0xf]
    %v75 = vld [vmem:[#allocation5 + $0x8] sm:$0xf]
    %v76 = vld [vmem:[#allocation5 + $0x14] sm:$0xf]
    %v77 = vld [vmem:[#allocation5 + $0x20] sm:$0xf]
    %v78 = vld [vmem:[#allocation5 + $0x2c] sm:$0x3]
    %v79 = vld [vmem:[%s1] sm:$0xf]
    %v80 = vld [vmem:[%s1 + $0x4] sm:$0xf]
    %v81 = vld [vmem:[%s3 + $0x8] sm:$0x7]
    %v84 = vunpack.c.l.b16 %v79
    %v85 = vunpack.c.l.b16 %v80
    %v86 = vpack.c.b16 %v85, %v84
    %v88 = vunpack.c.l.b16 %v81
    %v89 = vpack.c.b16 %v88, %v88
    %vm90 = vcmask 39936
    %v92 = vsel %vm90, %v86, 0
    %vm94 = vcmask 1041408
    %vm95 = vcmask 1042432
    %v96 = vsel %vm94, 4294967295, 65535
    %v97 = vsel %vm95, %v96, 0
    %v99 = vand.u32 %v89, %v97
    %101 = vmatprep.subr.bf16.mxu0 0
    %102 = vmatpush1.bf16.msra.mxu0 %v99
    %103 = vmatprep.subr.bf16.mxu0 0
    %104 = vmatpush1.bf16.msra.mxu0 0
    %105 = vmatprep.subr.bf16.mxu0 0
    %106 = vmatpush1.bf16.msra.mxu0 0
    %107 = vmatprep.subr.bf16.mxu0 0
    %108 = vmatpush1.bf16.msra.mxu0 0
    %109 = vmatprep.subr.bf16.mxu0 0
    %110 = vmatpush1.bf16.msra.mxu0 0
    %111 = vmatprep.subr.bf16.mxu0 0
    %112 = vmatpush1.bf16.msra.mxu0 0
    %113 = vmatprep.subr.bf16.mxu0 0
    %114 = vmatpush1.bf16.msra.mxu0 0
    %115 = vmatprep.subr.bf16.mxu0 0
    %116 = vmatpush1.bf16.msra.mxu0 0
    %117 = vmatprep.subr.bf16.mxu0 0
    %118 = vmatpush1.bf16.msra.mxu0 0
    %119 = vmatprep.subr.bf16.mxu0 0
    %120 = vmatpush1.bf16.msra.mxu0 0
    %121 = vmatprep.subr.bf16.mxu0 0
    %122 = vmatpush1.bf16.msra.mxu0 0
    %123 = vmatprep.subr.bf16.mxu0 0
    %124 = vmatpush1.bf16.msra.mxu0 0
    %125 = vmatprep.subr.bf16.mxu0 0
    %126 = vmatpush1.bf16.msra.mxu0 0
    %127 = vmatprep.subr.bf16.mxu0 0
    %128 = vmatpush1.bf16.msra.mxu0 0
    %129 = vmatprep.subr.bf16.mxu0 0
    %130 = vmatpush1.bf16.msra.mxu0 0
    %131 = vmatprep.subr.bf16.mxu0 0
    %132 = vmatpush1.bf16.msra.mxu0 0
    %133 = vmatprep.mubr.bf16.mxu0 0
    %134 = vmatmul.mubr.bf16.gmra.mrb[0].mxu0 %v92
    %v135 = vpop.f32.mrb[0].mxu0
    %v136 = vadd.f32 0.0, %v135
    %v137 = vpop.f32.mrb[0].mxu0
    %v138 = vpop.f32.mrb[0].mxu0
    %v139 = vadd.f32 0.0, %v138
    %v140 = vpop.f32.mrb[0].mxu0
    %141 = vdwg.mxu0
    %v144 = vunpack.c.l.b16 %v73
    %v145 = vunpack.c.l.b16 %v74
    %v146 = vpack.c.b16 %v145, %v144
    %v151 = vunpack.c.l.b16 %v75
    %v152 = vunpack.c.l.b16 %v76
    %v153 = vunpack.c.l.b16 %v77
    %v154 = vunpack.c.l.b16 %v78
    %v155 = vpack.c.b16 %v152, %v151
    %v156 = vpack.c.b16 %v154, %v153
    %vm158 = vcmask 228352
    %v160 = vsel %vm158, %v146, 0
    %vm162 = vcmask 1045504
    %v164 = vsel %vm162, %v156, 0
    %166 = vmatprep.subr.bf16.mxu0 0
    %167 = vmatpush1.bf16.msra.mxu0 %v155
    %168 = vmatprep.subr.bf16.mxu0 0
    %169 = vmatpush1.bf16.msra.mxu0 %v164
    %170 = vmatprep.subr.bf16.mxu0 0
    %171 = vmatpush1.bf16.msra.mxu0 0
    %172 = vmatprep.subr.bf16.mxu0 0
    %173 = vmatpush1.bf16.msra.mxu0 0
    %174 = vmatprep.subr.bf16.mxu0 0
    %175 = vmatpush1.bf16.msra.mxu0 0
    %176 = vmatprep.subr.bf16.mxu0 0
    %177 = vmatpush1.bf16.msra.mxu0 0
    %178 = vmatprep.subr.bf16.mxu0 0
    %179 = vmatpush1.bf16.msra.mxu0 0
    %180 = vmatprep.subr.bf16.mxu0 0
    %181 = vmatpush1.bf16.msra.mxu0 0
    %182 = vmatprep.subr.bf16.mxu0 0
    %183 = vmatpush1.bf16.msra.mxu0 0
    %184 = vmatprep.subr.bf16.mxu0 0
    %185 = vmatpush1.bf16.msra.mxu0 0
    %186 = vmatprep.subr.bf16.mxu0 0
    %187 = vmatpush1.bf16.msra.mxu0 0
    %188 = vmatprep.subr.bf16.mxu0 0
    %189 = vmatpush1.bf16.msra.mxu0 0
    %190 = vmatprep.subr.bf16.mxu0 0
    %191 = vmatpush1.bf16.msra.mxu0 0
    %192 = vmatprep.subr.bf16.mxu0 0
    %193 = vmatpush1.bf16.msra.mxu0 0
    %194 = vmatprep.subr.bf16.mxu0 0
    %195 = vmatpush1.bf16.msra.mxu0 0
    %196 = vmatprep.subr.bf16.mxu0 0
    %197 = vmatpush1.bf16.msra.mxu0 0
    %198 = vmatprep.mubr.bf16.mxu0 0
    %199 = vmatmul.mubr.bf16.gmra.mrb[0].mxu0 %v160
    %v200 = vpop.f32.mrb[0].mxu0
    %v201 = vadd.f32 %v136, %v200
    %v202 = vpop.f32.mrb[0].mxu0
    %v203 = vpop.f32.mrb[0].mxu0
    %v204 = vadd.f32 %v139, %v203
    %v205 = vpop.f32.mrb[0].mxu0
    %206 = vdwg.mxu0
    %v207 = vld [vmem:[#allocation7] sm:$0x7]
    %v209 = vlaneseq
    %v210 = vshrl.u32 %v209, 7
    %v211 = vsub.s32 2, %v210
    %v212 = vrot.slane %v207, %v211
    %v214 = vadd.f32 %v201, %v212
    %v215 = vadd.f32 %v204, %v212
    %218 = vrot.lane.b32.xlu0 %v214, 96
    %v219 = vpop.permute.xlu0 %218
    %220 = vrot.lane.b32.xlu0 %v215, 96
    %v221 = vpop.permute.xlu0 %220
    %vm224 = vcmask 261120
    %v225 = vsel %vm224, %v219, 0.0
    %226 = vadd.xlane.f32.xlu0 %v225
    %v227 = vpop.xlane.xlu0 %226
    %v228 = vsel %vm224, %v221, 0.0
    %229 = vadd.xlane.f32.xlu0 %v228
    %v230 = vpop.xlane.xlu0 %229
    %v231 = vrcp.pop 32.0
    %v232 = vmul.f32 %v227, %v231
    %v233 = vmul.f32 %v230, %v231
    %v234 = vsub.f32 %v214, %v232
    %v235 = vsub.f32 %v215, %v233
    %v236 = vmul.f32 %v234, %v234
    %v237 = vmul.f32 %v235, %v235
    %240 = vrot.lane.b32.xlu0 %v236, 96
    %v241 = vpop.permute.xlu0 %240
    %242 = vrot.lane.b32.xlu0 %v237, 96
    %v243 = vpop.permute.xlu0 %242
    %v246 = vsel %vm224, %v241, 0.0
    %247 = vadd.xlane.f32.xlu0 %v246
    %v248 = vpop.xlane.xlu0 %247
    %v249 = vsel %vm224, %v243, 0.0
    %250 = vadd.xlane.f32.xlu0 %v249
    %v251 = vpop.xlane.xlu0 %250
    %v252 = vmul.f32 %v248, %v231
    %v253 = vmul.f32 %v251, %v231
    %v254 = vadd.f32 %v252, 1e-05
    %v255 = vadd.f32 %v253, 1e-05
    %v256 = vrsqrt.pop %v254
    %v257 = vrsqrt.pop %v255
    %v258 = vmul.f32 %v234, %v256
    %v259 = vmul.f32 %v235, %v257
    %v260 = vld [vmem:[%s5] sm:$0x1]
    %v262 = vlaneseq
    %v263 = vshrl.u32 %v262, 7
    %v264 = vsub.s32 0, %v263
    %v265 = vrot.slane %v260, %v264
    %266 = vrot.lane.b32.xlu0 %v265, 32
    %v267 = vpop.permute.xlu0 %266
    %v269 = vmul.f32 %v258, %v267
    %v270 = vmul.f32 %v259, %v267
    %v271 = vld [vmem:[%s6] sm:$0x1]
    %v273 = vlaneseq
    %v274 = vshrl.u32 %v273, 7
    %v275 = vsub.s32 0, %v274
    %v276 = vrot.slane %v271, %v275
    %277 = vrot.lane.b32.xlu0 %v276, 32
    %v278 = vpop.permute.xlu0 %277
    %v280 = vadd.f32 %v269, %v278
    %v281 = vadd.f32 %v270, %v278
    %v282 = vmax.f32 %v280, 0.0
    %v283 = vmax.f32 %v281, 0.0
    %v284 = vpack.c.bf16 %v283, %v282
    %v285 = vld [vmem:[%s7] sm:$0xf]
    %v286 = vld [vmem:[%s7 + $0x4] sm:$0xf]
    %v287 = vld [vmem:[%s7 + $0x8] sm:$0xf]
    %v288 = vld [vmem:[%s7 + $0xc] sm:$0xf]
    %v289 = vld [vmem:[%s8] sm:$0x1]
    %v291 = vlaneseq
    %v292 = vshrl.u32 %v291, 7
    %v293 = vsub.s32 0, %v292
    %v294 = vrot.slane %v289, %v293
    %297 = vrot.lane.b32.xlu0 %v284, 96
    %v298 = vpop.permute.xlu0 %297
    %v303 = vunpack.c.l.b16 %v285
    %v304 = vunpack.c.l.b16 %v286
    %v305 = vunpack.c.l.b16 %v287
    %v306 = vunpack.c.l.b16 %v288
    %v307 = vpack.c.b16 %v304, %v303
    %v308 = vpack.c.b16 %v306, %v305
    %v312 = vsel %vm224, %v298, 0
    %314 = vmatprep.subr.bf16.mxu0 0
    %315 = vmatpush1.bf16.msra.mxu0 %v307
    %316 = vmatprep.subr.bf16.mxu0 0
    %317 = vmatpush1.bf16.msra.mxu0 %v308
    %318 = vmatprep.subr.bf16.mxu0 0
    %319 = vmatpush1.bf16.msra.mxu0 0
    %320 = vmatprep.subr.bf16.mxu0 0
    %321 = vmatpush1.bf16.msra.mxu0 0
    %322 = vmatprep.subr.bf16.mxu0 0
    %323 = vmatpush1.bf16.msra.mxu0 0
    %324 = vmatprep.subr.bf16.mxu0 0
    %325 = vmatpush1.bf16.msra.mxu0 0
    %326 = vmatprep.subr.bf16.mxu0 0
    %327 = vmatpush1.bf16.msra.mxu0 0
    %328 = vmatprep.subr.bf16.mxu0 0
    %329 = vmatpush1.bf16.msra.mxu0 0
    %330 = vmatprep.subr.bf16.mxu0 0
    %331 = vmatpush1.bf16.msra.mxu0 0
    %332 = vmatprep.subr.bf16.mxu0 0
    %333 = vmatpush1.bf16.msra.mxu0 0
    %334 = vmatprep.subr.bf16.mxu0 0
    %335 = vmatpush1.bf16.msra.mxu0 0
    %336 = vmatprep.subr.bf16.mxu0 0
    %337 = vmatpush1.bf16.msra.mxu0 0
    %338 = vmatprep.subr.bf16.mxu0 0
    %339 = vmatpush1.bf16.msra.mxu0 0
    %340 = vmatprep.subr.bf16.mxu0 0
    %341 = vmatpush1.bf16.msra.mxu0 0
    %342 = vmatprep.subr.bf16.mxu0 0
    %343 = vmatpush1.bf16.msra.mxu0 0
    %344 = vmatprep.subr.bf16.mxu0 0
    %345 = vmatpush1.bf16.msra.mxu0 0
    %346 = vmatprep.mubr.bf16.mxu0 0
    %347 = vmatmul.mubr.bf16.gmra.mrb[0].mxu0 %v312
    %v348 = vpop.f32.mrb[0].mxu0
    %v349 = vadd.f32 %v294, %v348
    %v350 = vpop.f32.mrb[0].mxu0
    %v351 = vpop.f32.mrb[0].mxu0
    %v352 = vadd.f32 %v294, %v351
    %v353 = vpop.f32.mrb[0].mxu0
    %354 = vdwg.mxu0
    %355 = vst [vmem:[#allocation8] sm:$0xff] %v349
    %356 = vst [vmem:[#allocation8 + $0x8] sm:$0xff] %v352
    // Predicated region
    $region50: #{tpu_custom_call.1} parent=1 // pred_check
      _
    $region51: #{tpu_custom_call.1} parent=1 // pred_check_branch
      %358 = sbr.rel (0) target = $region53
    $region52: #{tpu_custom_call.1} parent=1 // pred_region
      %s360 = ssub.s32 256, 256
      %361 = vsyncadd [#allocation4], %s360
      %s362 = sshll.u32 [#allocation8], 4
      %s363 = int_to_ptr.vmem [resolvable:$true] %s362
      %368 = dma.vmem_to_hbm [thread:$0]  %s363, 256, %s9, [#allocation4], 128, 128, 8
    $region53: #{tpu_custom_call.1} parent=1 // pred_fallthru
      _
    // Predicated region
    $region54: #{tpu_custom_call.1} parent=1 // pred_check
      _
    $region55: #{tpu_custom_call.1} parent=1 // pred_check_branch
      %370 = sbr.rel (0) target = $region57
    $region56: #{tpu_custom_call.1} parent=1 // pred_region
      %371 = dma.done [#allocation4], 256
    $region57: #{tpu_custom_call.1} parent=1 // pred_fallthru
      _
    %372 = vsyncpa [#allocation3], 1
    %373 = vsyncpa [#allocation6], 1
    %374 = vsyncpa [#allocation4], 1

</llo_original>
